<compile_context>
chip_gen: v7x
topology: tpu7x:2x2x1
jax: 0.10.0
libtpu: 0.0.40
codegen_flags: <defaults>
</compile_context>

<pallas_src>
import jax
import jax.numpy as jnp
from jax.experimental import pallas as pl
from jax.experimental.pallas import tpu as pltpu


# ----------------------------- Pallas kernel -------------------------------

def _critic_fused_kernel(s_ref, a_ref,
                         w1s_ref, w1a_ref, b1_ref,
                         w2_ref, b2_ref,
                         w3_ref, b3_ref,
                         q_ref):
    # Layer 1: sa @ W1  ==  state @ W1[:S] + action @ W1[S:]   (concat folded in)
    h = (jnp.dot(s_ref[...], w1s_ref[...], preferred_element_type=jnp.float32)
         + jnp.dot(a_ref[...], w1a_ref[...], preferred_element_type=jnp.float32)
         + b1_ref[...])
    h = jnp.maximum(h, 0.0)
    # Layer 2: block-diagonal(w2, w5) keeps the two heads independent.
    h = jnp.dot(h, w2_ref[...], preferred_element_type=jnp.float32) + b2_ref[...]
    h = jnp.maximum(h, 0.0)
    # Layer 3: [2H, 2] block-structured weight -> column 0 = q1, column 1 = q2.
    q = jnp.dot(h, w3_ref[...], preferred_element_type=jnp.float32) + b3_ref[...]
    q_ref[...] = q.astype(q_ref.dtype)


# ------------------------------ param packing ------------------------------

def init_critic_params(key, state_dim, action_dim, hidden_dim):
    """nn.Linear-style init; weights stored pre-transposed as [in, out]."""
    in_dim = state_dim + action_dim

    def linear(k, fan_in, fan_out):
        kw, kb = jax.random.split(k)
        bound = 1.0 / jnp.sqrt(fan_in)
        w = jax.random.uniform(kw, (fan_in, fan_out), jnp.float32, -bound, bound)
        b = jax.random.uniform(kb, (1, fan_out), jnp.float32, -bound, bound)
        return w, b

    keys = jax.random.split(key, 6)
    w1, b1 = linear(keys[0], in_dim, hidden_dim)
    w2, b2 = linear(keys[1], hidden_dim, hidden_dim)
    w3, b3 = linear(keys[2], hidden_dim, 1)
    w4, b4 = linear(keys[3], in_dim, hidden_dim)
    w5, b5 = linear(keys[4], hidden_dim, hidden_dim)
    w6, b6 = linear(keys[5], hidden_dim, 1)
    return (w1, b1, w2, b2, w3, b3, w4, b4, w5, b5, w6, b6)


def pack_critic_params(params, state_dim):
    """Fuse the twin-head weights into shared wide matrices (do this once)."""
    (w1, b1, w2, b2, w3, b3, w4, b4, w5, b5, w6, b6) = params
    H = w1.shape[1]
    zH = jnp.zeros((H, H), w2.dtype)
    z1 = jnp.zeros((H, 1), w3.dtype)

    w1f = jnp.concatenate([w1, w4], axis=1)            # [in_dim, 2H]
    b1f = jnp.concatenate([b1, b4], axis=1)            # [1, 2H]
    w2f = jnp.block([[w2, zH], [zH, w5]])              # [2H, 2H] block-diagonal
    b2f = jnp.concatenate([b2, b5], axis=1)            # [1, 2H]
    w3f = jnp.block([[w3, z1], [z1, w6]])              # [2H, 2]
    b3f = jnp.concatenate([b3, b6], axis=1)            # [1, 2]

    # Split layer-1 rows so the kernel can consume state/action separately.
    w1s = w1f[:state_dim]                              # [S, 2H]
    w1a = w1f[state_dim:]                              # [A, 2H]
    return (w1s, w1a, b1f, w2f, b2f, w3f, b3f)


# ------------------------------ forward wrapper ----------------------------

def _round_up(x, m):
    return ((x + m - 1) // m) * m


def critic_forward(state, action, packed_params, *, block_b=None):
    """Pallas forward of the twin-Q Critic. Returns (q1, q2), each [B, 1]."""
    B, S = state.shape
    A = action.shape[1]
    (w1s, w1a, b1f, w2f, b2f, w3f, b3f) = packed_params
    two_h = w2f.shape[0]

    # Batch tile: multiple of 8 sublanes, capped for VMEM / pipelining.
    if block_b is None:
        block_b = min(512, _round_up(B, 8))
    block_b = _round_up(block_b, 8)
    B_pad = _round_up(B, block_b)
    if B_pad != B:
        state = jnp.pad(state, ((0, B_pad - B), (0, 0)))
        action = jnp.pad(action, ((0, B_pad - B), (0, 0)))

    grid = (B_pad // block_b,)

    def batch_spec(cols):
        return pl.BlockSpec((block_b, cols), lambda i: (i, 0))

    def resident_spec(shape):
        # Full-array block, constant index -> stays VMEM-resident across grid.
        return pl.BlockSpec(shape, lambda i: (0, 0))

    in_specs = [
        batch_spec(S),                    # state tile
        batch_spec(A),                    # action tile
        resident_spec(w1s.shape),
        resident_spec(w1a.shape),
        resident_spec(b1f.shape),
        resident_spec(w2f.shape),
        resident_spec(b2f.shape),
        resident_spec(w3f.shape),
        resident_spec(b3f.shape),
    ]
    out_specs = pl.BlockSpec((block_b, 2), lambda i: (i, 0))

    q = pl.pallas_call(
        _critic_fused_kernel,
        out_shape=jax.ShapeDtypeStruct((B_pad, 2), jnp.float32),
        grid=grid,
        in_specs=in_specs,
        out_specs=out_specs,
        compiler_params=pltpu.CompilerParams(
            dimension_semantics=("parallel",)),
    )(state, action, w1s, w1a, b1f, w2f, b2f, w3f, b3f)

    q = q[:B]
    return q[:, 0:1], q[:, 1:2]


# ------------------------------ reference ----------------------------------

def _reference_forward(state, action, params):
    (w1, b1, w2, b2, w3, b3, w4, b4, w5, b5, w6, b6) = params
    sa = jnp.concatenate([state, action], axis=1)
    q1 = jnp.maximum(sa @ w1 + b1, 0.0)
    q1 = jnp.maximum(q1 @ w2 + b2, 0.0)
    q1 = q1 @ w3 + b3
    q2 = jnp.maximum(sa @ w4 + b4, 0.0)
    q2 = jnp.maximum(q2 @ w5 + b5, 0.0)
    q2 = q2 @ w6 + b6
    return q1, q2


if __name__ == "__main__":
    key = jax.random.PRNGKey(0)
    k_params, k_state, k_action = jax.random.split(key, 3)

    batch, state_dim, action_dim, hidden_dim = 8, 6, 2, 32

    params = init_critic_params(k_params, state_dim, action_dim, hidden_dim)
    packed = pack_critic_params(params, state_dim)

    state = jax.random.normal(k_state, (batch, state_dim), jnp.float32)
    action = jax.random.normal(k_action, (batch, action_dim), jnp.float32)

    q1, q2 = critic_forward(state, action, packed)
    q1 = jax.block_until_ready(q1)
    q2 = jax.block_until_ready(q2)

    # correctness check against pure-JAX reference
    r1, r2 = _reference_forward(state, action, params)
    assert q1.shape == (batch, 1) and q2.shape == (batch, 1)
    assert jnp.allclose(q1, r1, atol=1e-5, rtol=1e-5)
    assert jnp.allclose(q2, r2, atol=1e-5, rtol=1e-5)

    print("KERNEL_OK")
</pallas_src>

<mosaic_0001>
module attributes {stable_mosaic.version = 11 : i64} {
  func.func @_critic_fused_kernel(%arg0: i32, %arg1: memref<8x6xf32, #tpu.memory_space<vmem>>, %arg2: memref<8x2xf32, #tpu.memory_space<vmem>>, %arg3: memref<6x64xf32, #tpu.memory_space<vmem>>, %arg4: memref<2x64xf32, #tpu.memory_space<vmem>>, %arg5: memref<1x64xf32, #tpu.memory_space<vmem>>, %arg6: memref<64x64xf32, #tpu.memory_space<vmem>>, %arg7: memref<1x64xf32, #tpu.memory_space<vmem>>, %arg8: memref<64x2xf32, #tpu.memory_space<vmem>>, %arg9: memref<1x2xf32, #tpu.memory_space<vmem>>, %arg10: memref<8x2xf32, #tpu.memory_space<vmem>>) attributes {dimension_semantics = [#tpu.dimension_semantics<parallel>], iteration_bounds = array<i64: 1>, scalar_prefetch = 0 : i64, scratch_operands = 0 : i64, tpu.core_type = #tpu.core_type<tc>, window_params = [{transform_indices = @transform_0, window_bounds = array<i64: 8, 6>}, {transform_indices = @transform_1, window_bounds = array<i64: 8, 2>}, {pipeline_mode = #tpu.pipeline_mode<synchronous>, transform_indices = @transform_2, window_bounds = array<i64: 6, 64>}, {pipeline_mode = #tpu.pipeline_mode<synchronous>, transform_indices = @transform_3, window_bounds = array<i64: 2, 64>}, {pipeline_mode = #tpu.pipeline_mode<synchronous>, transform_indices = @transform_4, window_bounds = array<i64: 1, 64>}, {pipeline_mode = #tpu.pipeline_mode<synchronous>, transform_indices = @transform_5, window_bounds = array<i64: 64, 64>}, {pipeline_mode = #tpu.pipeline_mode<synchronous>, transform_indices = @transform_6, window_bounds = array<i64: 1, 64>}, {pipeline_mode = #tpu.pipeline_mode<synchronous>, transform_indices = @transform_7, window_bounds = array<i64: 64, 2>}, {pipeline_mode = #tpu.pipeline_mode<synchronous>, transform_indices = @transform_8, window_bounds = array<i64: 1, 2>}, {transform_indices = @transform_9, window_bounds = array<i64: 8, 2>}]} {
    %c0 = arith.constant 0 : index
    %c0_0 = arith.constant 0 : index
    %0 = vector.load %arg1[%c0, %c0_0] : memref<8x6xf32, #tpu.memory_space<vmem>>, vector<8x6xf32>
    %c0_1 = arith.constant 0 : index
    %c0_2 = arith.constant 0 : index
    %1 = vector.load %arg3[%c0_1, %c0_2] : memref<6x64xf32, #tpu.memory_space<vmem>>, vector<6x64xf32>
    %cst = arith.constant dense<0.000000e+00> : vector<8x64xf32>
    %2 = tpu.matmul %0, %1, %cst {dimension_numbers = #tpu.dot_dimension_numbers<[1], [0], [0], [1], [0, 0, 1, 1], [], []>} : vector<8x6xf32>, vector<6x64xf32>, vector<8x64xf32> -> vector<8x64xf32>
    %c0_3 = arith.constant 0 : index
    %c0_4 = arith.constant 0 : index
    %3 = vector.load %arg2[%c0_3, %c0_4] : memref<8x2xf32, #tpu.memory_space<vmem>>, vector<8x2xf32>
    %c0_5 = arith.constant 0 : index
    %c0_6 = arith.constant 0 : index
    %4 = vector.load %arg4[%c0_5, %c0_6] : memref<2x64xf32, #tpu.memory_space<vmem>>, vector<2x64xf32>
    %cst_7 = arith.constant dense<0.000000e+00> : vector<8x64xf32>
    %5 = tpu.matmul %3, %4, %cst_7 {dimension_numbers = #tpu.dot_dimension_numbers<[1], [0], [0], [1], [0, 0, 1, 1], [], []>} : vector<8x2xf32>, vector<2x64xf32>, vector<8x64xf32> -> vector<8x64xf32>
    %6 = arith.addf %2, %5 : vector<8x64xf32>
    %c0_8 = arith.constant 0 : index
    %c0_9 = arith.constant 0 : index
    %7 = vector.load %arg5[%c0_8, %c0_9] : memref<1x64xf32, #tpu.memory_space<vmem>>, vector<1x64xf32>
    %8 = vector.broadcast %7 : vector<1x64xf32> to vector<8x64xf32>
    %9 = arith.addf %6, %8 : vector<8x64xf32>
    %cst_10 = arith.constant 0.000000e+00 : f32
    %10 = vector.broadcast %cst_10 : f32 to vector<8x64xf32>
    %11 = arith.maximumf %9, %10 : vector<8x64xf32>
    %c0_11 = arith.constant 0 : index
    %c0_12 = arith.constant 0 : index
    %12 = vector.load %arg6[%c0_11, %c0_12] : memref<64x64xf32, #tpu.memory_space<vmem>>, vector<64x64xf32>
    %cst_13 = arith.constant dense<0.000000e+00> : vector<8x64xf32>
    %13 = tpu.matmul %11, %12, %cst_13 {dimension_numbers = #tpu.dot_dimension_numbers<[1], [0], [0], [1], [0, 0, 1, 1], [], []>} : vector<8x64xf32>, vector<64x64xf32>, vector<8x64xf32> -> vector<8x64xf32>
    %c0_14 = arith.constant 0 : index
    %c0_15 = arith.constant 0 : index
    %14 = vector.load %arg7[%c0_14, %c0_15] : memref<1x64xf32, #tpu.memory_space<vmem>>, vector<1x64xf32>
    %15 = vector.broadcast %14 : vector<1x64xf32> to vector<8x64xf32>
    %16 = arith.addf %13, %15 : vector<8x64xf32>
    %cst_16 = arith.constant 0.000000e+00 : f32
    %17 = vector.broadcast %cst_16 : f32 to vector<8x64xf32>
    %18 = arith.maximumf %16, %17 : vector<8x64xf32>
    %c0_17 = arith.constant 0 : index
    %c0_18 = arith.constant 0 : index
    %19 = vector.load %arg8[%c0_17, %c0_18] : memref<64x2xf32, #tpu.memory_space<vmem>>, vector<64x2xf32>
    %cst_19 = arith.constant dense<0.000000e+00> : vector<8x2xf32>
    %20 = tpu.matmul %18, %19, %cst_19 {dimension_numbers = #tpu.dot_dimension_numbers<[1], [0], [0], [1], [0, 0, 1, 1], [], []>} : vector<8x64xf32>, vector<64x2xf32>, vector<8x2xf32> -> vector<8x2xf32>
    %c0_20 = arith.constant 0 : index
    %c0_21 = arith.constant 0 : index
    %21 = vector.load %arg9[%c0_20, %c0_21] : memref<1x2xf32, #tpu.memory_space<vmem>>, vector<1x2xf32>
    %22 = vector.broadcast %21 : vector<1x2xf32> to vector<8x2xf32>
    %23 = arith.addf %20, %22 : vector<8x2xf32>
    %c0_22 = arith.constant 0 : index
    %c0_23 = arith.constant 0 : index
    %24 = vector.load %arg10[%c0_22, %c0_23] : memref<8x2xf32, #tpu.memory_space<vmem>>, vector<8x2xf32>
    tpu.vector_store %arg10[%c0_22, %c0_23], %23 {strides = array<i32>} : memref<8x2xf32, #tpu.memory_space<vmem>>, vector<8x2xf32>,
    return
  }
  func.func @transform_0(%arg0: i32) -> (i32, i32) {
    %c0_i32 = arith.constant 0 : i32
    %c0_i32_0 = arith.constant 0 : i32
    return %arg0, %c0_i32 : i32, i32
  }
  func.func @transform_1(%arg0: i32) -> (i32, i32) {
    %c0_i32 = arith.constant 0 : i32
    %c0_i32_0 = arith.constant 0 : i32
    return %arg0, %c0_i32 : i32, i32
  }
  func.func @transform_2(%arg0: i32) -> (i32, i32) {
    %c0_i32 = arith.constant 0 : i32
    %c0_i32_0 = arith.constant 0 : i32
    %c0_i32_1 = arith.constant 0 : i32
    return %c0_i32, %c0_i32_0 : i32, i32
  }
  func.func @transform_3(%arg0: i32) -> (i32, i32) {
    %c0_i32 = arith.constant 0 : i32
    %c0_i32_0 = arith.constant 0 : i32
    %c0_i32_1 = arith.constant 0 : i32
    return %c0_i32, %c0_i32_0 : i32, i32
  }
  func.func @transform_4(%arg0: i32) -> (i32, i32) {
    %c0_i32 = arith.constant 0 : i32
    %c0_i32_0 = arith.constant 0 : i32
    %c0_i32_1 = arith.constant 0 : i32
    return %c0_i32, %c0_i32_0 : i32, i32
  }
  func.func @transform_5(%arg0: i32) -> (i32, i32) {
    %c0_i32 = arith.constant 0 : i32
    %c0_i32_0 = arith.constant 0 : i32
    %c0_i32_1 = arith.constant 0 : i32
    return %c0_i32, %c0_i32_0 : i32, i32
  }
  func.func @transform_6(%arg0: i32) -> (i32, i32) {
    %c0_i32 = arith.constant 0 : i32
    %c0_i32_0 = arith.constant 0 : i32
    %c0_i32_1 = arith.constant 0 : i32
    return %c0_i32, %c0_i32_0 : i32, i32
  }
  func.func @transform_7(%arg0: i32) -> (i32, i32) {
    %c0_i32 = arith.constant 0 : i32
    %c0_i32_0 = arith.constant 0 : i32
    %c0_i32_1 = arith.constant 0 : i32
    return %c0_i32, %c0_i32_0 : i32, i32
  }
  func.func @transform_8(%arg0: i32) -> (i32, i32) {
    %c0_i32 = arith.constant 0 : i32
    %c0_i32_0 = arith.constant 0 : i32
    %c0_i32_1 = arith.constant 0 : i32
    return %c0_i32, %c0_i32_0 : i32, i32
  }
  func.func @transform_9(%arg0: i32) -> (i32, i32) {
    %c0_i32 = arith.constant 0 : i32
    %c0_i32_0 = arith.constant 0 : i32
    return %arg0, %c0_i32 : i32, i32
  }
}

</mosaic_0001>

<llo_original>
// kernel: tpu_custom_call.1
$region0: #{tpu_custom_call.1}
  #allocation0 [shape = 'u32[]', space=smem, size = 0x4, offset = 0x4, fixed_abs, tag = 'smem constant byte address 0x4 - core index']
  #allocation1 [shape = 'u32[144,128]{1,0:T(1,128)}', space=vmem, size = 0x12000, scoped, tag = 'internal scratch']
  %s0 = inlined_call_operand.vmem [shape: f32[8,6], index: 0, kind: input, shape index: {}]
  %s1 = inlined_call_operand.vmem [shape: f32[8,2], index: 1, kind: input, shape index: {}]
  %s2 = inlined_call_operand.vmem [shape: f32[6,64], index: 2, kind: input, shape index: {}]
  %s3 = inlined_call_operand.vmem [shape: f32[2,64], index: 3, kind: input, shape index: {}]
  %s4 = inlined_call_operand.vmem [shape: f32[1,64], index: 4, kind: input, shape index: {}]
  %s5 = inlined_call_operand.vmem [shape: f32[64,64], index: 5, kind: input, shape index: {}]
  %s6 = inlined_call_operand.vmem [shape: f32[1,64], index: 6, kind: input, shape index: {}]
  %s7 = inlined_call_operand.vmem [shape: f32[64,2], index: 7, kind: input, shape index: {}]
  %s8 = inlined_call_operand.vmem [shape: f32[1,2], index: 8, kind: input, shape index: {}]
  %s9 = inlined_call_operand.vmem [shape: f32[8,2], index: 9, kind: output, shape index: {}]
  %s10 = sld [smem:[#allocation0]]
  $region46: #{tpu_custom_call.1} parent=0
    _
  %s12 = ssub.s32 1, %s10
  %s13 = scalar_select 0, %s12, %s10
  // Predicated region
  $region2: #{tpu_custom_call.1} parent=0 // pred_check
    _
  $region3: #{tpu_custom_call.1} parent=0 // pred_check_branch
    %15 = sbr.rel (0) target = $region5
  $region4: #{tpu_custom_call.1} parent=0 // pred_region
    _
  $region5: #{tpu_custom_call.1} parent=0 // pred_fallthru
    _
  // Predicated region
  $region6: #{tpu_custom_call.1} parent=0 // pred_check
    _
  $region7: #{tpu_custom_call.1} parent=0 // pred_check_branch
    %17 = sbr.rel (0) target = $region9
  $region8: #{tpu_custom_call.1} parent=0 // pred_region
    _
  $region9: #{tpu_custom_call.1} parent=0 // pred_fallthru
    _
  // Predicated region
  $region10: #{tpu_custom_call.1} parent=0 // pred_check
    _
  $region11: #{tpu_custom_call.1} parent=0 // pred_check_branch
    %19 = sbr.rel (0) target = $region13
  $region12: #{tpu_custom_call.1} parent=0 // pred_region
    _
  $region13: #{tpu_custom_call.1} parent=0 // pred_fallthru
    _
  // Predicated region
  $region14: #{tpu_custom_call.1} parent=0 // pred_check
    _
  $region15: #{tpu_custom_call.1} parent=0 // pred_check_branch
    %21 = sbr.rel (0) target = $region17
  $region16: #{tpu_custom_call.1} parent=0 // pred_region
    _
  $region17: #{tpu_custom_call.1} parent=0 // pred_fallthru
    _
  // Predicated region
  $region18: #{tpu_custom_call.1} parent=0 // pred_check
    _
  $region19: #{tpu_custom_call.1} parent=0 // pred_check_branch
    %23 = sbr.rel (0) target = $region21
  $region20: #{tpu_custom_call.1} parent=0 // pred_region
    _
  $region21: #{tpu_custom_call.1} parent=0 // pred_fallthru
    _
  // Predicated region
  $region22: #{tpu_custom_call.1} parent=0 // pred_check
    _
  $region23: #{tpu_custom_call.1} parent=0 // pred_check_branch
    %25 = sbr.rel (0) target = $region25
  $region24: #{tpu_custom_call.1} parent=0 // pred_region
    _
  $region25: #{tpu_custom_call.1} parent=0 // pred_fallthru
    _
  // Predicated region
  $region26: #{tpu_custom_call.1} parent=0 // pred_check
    _
  $region27: #{tpu_custom_call.1} parent=0 // pred_check_branch
    %27 = sbr.rel (0) target = $region29
  $region28: #{tpu_custom_call.1} parent=0 // pred_region
    _
  $region29: #{tpu_custom_call.1} parent=0 // pred_fallthru
    _
  // Predicated region
  $region30: #{tpu_custom_call.1} parent=0 // pred_check
    _
  $region31: #{tpu_custom_call.1} parent=0 // pred_check_branch
    %29 = sbr.rel (0) target = $region33
  $region32: #{tpu_custom_call.1} parent=0 // pred_region
    _
  $region33: #{tpu_custom_call.1} parent=0 // pred_fallthru
    _
  // Predicated region
  $region34: #{tpu_custom_call.1} parent=0 // pred_check
    _
  $region35: #{tpu_custom_call.1} parent=0 // pred_check_branch
    %31 = sbr.rel (0) target = $region37
  $region36: #{tpu_custom_call.1} parent=0 // pred_region
    _
  $region37: #{tpu_custom_call.1} parent=0 // pred_fallthru
    _
  %v32 = vld [vmem:[%s0] sm:$0xff]
  %v33 = vld [vmem:[%s2] sm:$0x3f]
  %v34 = vld [vmem:[%s1] sm:$0xff]
  %v35 = vld [vmem:[%s3] sm:$0x3]
  %vm36 = vcmask 15360
  %v38 = vsel %vm36, %v34, 0
  %vm40 = vcmask 1041408
  %v42 = vsel %vm40, %v35, 0
  %44 = vmatprep.subr.mxu0 0.0
  %45 = vmatpush1.msra.mxu0 %v42
  %46 = vmatprep.subr.mxu0 0.0
  %47 = vmatpush1.msra.mxu0 0.0
  %48 = vmatprep.subr.mxu0 0.0
  %49 = vmatpush1.msra.mxu0 0.0
  %50 = vmatprep.subr.mxu0 0.0
  %51 = vmatpush1.msra.mxu0 0.0
  %52 = vmatprep.subr.mxu0 0.0
  %53 = vmatpush1.msra.mxu0 0.0
  %54 = vmatprep.subr.mxu0 0.0
  %55 = vmatpush1.msra.mxu0 0.0
  %56 = vmatprep.subr.mxu0 0.0
  %57 = vmatpush1.msra.mxu0 0.0
  %58 = vmatprep.subr.mxu0 0.0
  %59 = vmatpush1.msra.mxu0 0.0
  %60 = vmatprep.subr.mxu0 0.0
  %61 = vmatpush1.msra.mxu0 0.0
  %62 = vmatprep.subr.mxu0 0.0
  %63 = vmatpush1.msra.mxu0 0.0
  %64 = vmatprep.subr.mxu0 0.0
  %65 = vmatpush1.msra.mxu0 0.0
  %66 = vmatprep.subr.mxu0 0.0
  %67 = vmatpush1.msra.mxu0 0.0
  %68 = vmatprep.subr.mxu0 0.0
  %69 = vmatpush1.msra.mxu0 0.0
  %70 = vmatprep.subr.mxu0 0.0
  %71 = vmatpush1.msra.mxu0 0.0
  %72 = vmatprep.subr.mxu0 0.0
  %73 = vmatpush1.msra.mxu0 0.0
  %74 = vmatprep.subr.mxu0 0.0
  %75 = vmatpush1.msra.mxu0 0.0
  %76 = vmatprep.subr.mxu0 0.0
  %77 = vmatpush1.msra.mxu0 0.0
  %78 = vmatprep.subr.mxu0 0.0
  %79 = vmatpush1.msra.mxu0 0.0
  %80 = vmatprep.subr.mxu0 0.0
  %81 = vmatpush1.msra.mxu0 0.0
  %82 = vmatprep.subr.mxu0 0.0
  %83 = vmatpush1.msra.mxu0 0.0
  %84 = vmatprep.subr.mxu0 0.0
  %85 = vmatpush1.msra.mxu0 0.0
  %86 = vmatprep.subr.mxu0 0.0
  %87 = vmatpush1.msra.mxu0 0.0
  %88 = vmatprep.subr.mxu0 0.0
  %89 = vmatpush1.msra.mxu0 0.0
  %90 = vmatprep.subr.mxu0 0.0
  %91 = vmatpush1.msra.mxu0 0.0
  %92 = vmatprep.subr.mxu0 0.0
  %93 = vmatpush1.msra.mxu0 0.0
  %94 = vmatprep.subr.mxu0 0.0
  %95 = vmatpush1.msra.mxu0 0.0
  %96 = vmatprep.subr.mxu0 0.0
  %97 = vmatpush1.msra.mxu0 0.0
  %98 = vmatprep.subr.mxu0 0.0
  %99 = vmatpush1.msra.mxu0 0.0
  %100 = vmatprep.subr.mxu0 0.0
  %101 = vmatpush1.msra.mxu0 0.0
  %102 = vmatprep.subr.mxu0 0.0
  %103 = vmatpush1.msra.mxu0 0.0
  %104 = vmatprep.subr.mxu0 0.0
  %105 = vmatpush1.msra.mxu0 0.0
  %106 = vmatprep.subr.mxu0 0.0
  %107 = vmatpush1.msra.mxu0 0.0
  %108 = vmatprep.mubr.f32.mxu0 0.0
  %109 = vmatmul.mubr.f32.gmra.mrb[0].mxu0 %v38
  %v110 = vpop.f32.mrb[0].mxu0
  %v111 = vadd.f32 0.0, %v110
  %v112 = vpop.f32.mrb[0].mxu0
  %113 = vdwg.mxu0
  %vm114 = vcmask 48128
  %v116 = vsel %vm114, %v32, 0
  %vm118 = vcmask 1045504
  %v120 = vsel %vm118, %v33, 0
  %122 = vmatprep.subr.mxu0 0.0
  %123 = vmatpush1.msra.mxu0 %v120
  %124 = vmatprep.subr.mxu0 0.0
  %125 = vmatpush1.msra.mxu0 0.0
  %126 = vmatprep.subr.mxu0 0.0
  %127 = vmatpush1.msra.mxu0 0.0
  %128 = vmatprep.subr.mxu0 0.0
  %129 = vmatpush1.msra.mxu0 0.0
  %130 = vmatprep.subr.mxu0 0.0
  %131 = vmatpush1.msra.mxu0 0.0
  %132 = vmatprep.subr.mxu0 0.0
  %133 = vmatpush1.msra.mxu0 0.0
  %134 = vmatprep.subr.mxu0 0.0
  %135 = vmatpush1.msra.mxu0 0.0
  %136 = vmatprep.subr.mxu0 0.0
  %137 = vmatpush1.msra.mxu0 0.0
  %138 = vmatprep.subr.mxu0 0.0
  %139 = vmatpush1.msra.mxu0 0.0
  %140 = vmatprep.subr.mxu0 0.0
  %141 = vmatpush1.msra.mxu0 0.0
  %142 = vmatprep.subr.mxu0 0.0
  %143 = vmatpush1.msra.mxu0 0.0
  %144 = vmatprep.subr.mxu0 0.0
  %145 = vmatpush1.msra.mxu0 0.0
  %146 = vmatprep.subr.mxu0 0.0
  %147 = vmatpush1.msra.mxu0 0.0
  %148 = vmatprep.subr.mxu0 0.0
  %149 = vmatpush1.msra.mxu0 0.0
  %150 = vmatprep.subr.mxu0 0.0
  %151 = vmatpush1.msra.mxu0 0.0
  %152 = vmatprep.subr.mxu0 0.0
  %153 = vmatpush1.msra.mxu0 0.0
  %154 = vmatprep.subr.mxu0 0.0
  %155 = vmatpush1.msra.mxu0 0.0
  %156 = vmatprep.subr.mxu0 0.0
  %157 = vmatpush1.msra.mxu0 0.0
  %158 = vmatprep.subr.mxu0 0.0
  %159 = vmatpush1.msra.mxu0 0.0
  %160 = vmatprep.subr.mxu0 0.0
  %161 = vmatpush1.msra.mxu0 0.0
  %162 = vmatprep.subr.mxu0 0.0
  %163 = vmatpush1.msra.mxu0 0.0
  %164 = vmatprep.subr.mxu0 0.0
  %165 = vmatpush1.msra.mxu0 0.0
  %166 = vmatprep.subr.mxu0 0.0
  %167 = vmatpush1.msra.mxu0 0.0
  %168 = vmatprep.subr.mxu0 0.0
  %169 = vmatpush1.msra.mxu0 0.0
  %170 = vmatprep.subr.mxu0 0.0
  %171 = vmatpush1.msra.mxu0 0.0
  %172 = vmatprep.subr.mxu0 0.0
  %173 = vmatpush1.msra.mxu0 0.0
  %174 = vmatprep.subr.mxu0 0.0
  %175 = vmatpush1.msra.mxu0 0.0
  %176 = vmatprep.subr.mxu0 0.0
  %177 = vmatpush1.msra.mxu0 0.0
  %178 = vmatprep.subr.mxu0 0.0
  %179 = vmatpush1.msra.mxu0 0.0
  %180 = vmatprep.subr.mxu0 0.0
  %181 = vmatpush1.msra.mxu0 0.0
  %182 = vmatprep.subr.mxu0 0.0
  %183 = vmatpush1.msra.mxu0 0.0
  %184 = vmatprep.subr.mxu0 0.0
  %185 = vmatpush1.msra.mxu0 0.0
  %186 = vmatprep.mubr.f32.mxu0 0.0
  %187 = vmatmul.mubr.f32.gmra.mrb[0].mxu0 %v116
  %v188 = vpop.f32.mrb[0].mxu0
  %v189 = vadd.f32 %v111, %v188
  %v190 = vpop.f32.mrb[0].mxu0
  %191 = vdwg.mxu0
  %v192 = vld [vmem:[%s4] sm:$0x1]
  %v194 = vlaneseq
  %v195 = vshrl.u32 %v194, 7
  %v196 = vsub.s32 0, %v195
  %v197 = vrot.slane %v192, %v196
  %v199 = vadd.f32 %v189, %v197
  %v200 = vmax.f32 %v199, 0.0
  %v201 = vld [vmem:[%s5] sm:$0xff]
  %v202 = vld [vmem:[%s5 + $0x8] sm:$0xff]
  %v203 = vld [vmem:[%s5 + $0x10] sm:$0xff]
  %v204 = vld [vmem:[%s5 + $0x18] sm:$0xff]
  %v205 = vld [vmem:[%s5 + $0x20] sm:$0xff]
  %v206 = vld [vmem:[%s5 + $0x28] sm:$0xff]
  %v207 = vld [vmem:[%s5 + $0x30] sm:$0xff]
  %v208 = vld [vmem:[%s5 + $0x38] sm:$0xff]
  %v209 = vld [vmem:[%s6] sm:$0x1]
  %v211 = vlaneseq
  %v212 = vshrl.u32 %v211, 7
  %v213 = vsub.s32 0, %v212
  %v214 = vrot.slane %v209, %v213
  %vm216 = vcmask 523264
  %v218 = vsel %vm216, %v200, 0
  %220 = vmatprep.subr.mxu0 0.0
  %221 = vmatpush1.msra.mxu0 %v201
  %222 = vmatprep.subr.mxu0 0.0
  %223 = vmatpush1.msra.mxu0 %v202
  %224 = vmatprep.subr.mxu0 0.0
  %225 = vmatpush1.msra.mxu0 %v203
  %226 = vmatprep.subr.mxu0 0.0
  %227 = vmatpush1.msra.mxu0 %v204
  %228 = vmatprep.subr.mxu0 0.0
  %229 = vmatpush1.msra.mxu0 %v205
  %230 = vmatprep.subr.mxu0 0.0
  %231 = vmatpush1.msra.mxu0 %v206
  %232 = vmatprep.subr.mxu0 0.0
  %233 = vmatpush1.msra.mxu0 %v207
  %234 = vmatprep.subr.mxu0 0.0
  %235 = vmatpush1.msra.mxu0 %v208
  %236 = vmatprep.subr.mxu0 0.0
  %237 = vmatpush1.msra.mxu0 0.0
  %238 = vmatprep.subr.mxu0 0.0
  %239 = vmatpush1.msra.mxu0 0.0
  %240 = vmatprep.subr.mxu0 0.0
  %241 = vmatpush1.msra.mxu0 0.0
  %242 = vmatprep.subr.mxu0 0.0
  %243 = vmatpush1.msra.mxu0 0.0
  %244 = vmatprep.subr.mxu0 0.0
  %245 = vmatpush1.msra.mxu0 0.0
  %246 = vmatprep.subr.mxu0 0.0
  %247 = vmatpush1.msra.mxu0 0.0
  %248 = vmatprep.subr.mxu0 0.0
  %249 = vmatpush1.msra.mxu0 0.0
  %250 = vmatprep.subr.mxu0 0.0
  %251 = vmatpush1.msra.mxu0 0.0
  %252 = vmatprep.subr.mxu0 0.0
  %253 = vmatpush1.msra.mxu0 0.0
  %254 = vmatprep.subr.mxu0 0.0
  %255 = vmatpush1.msra.mxu0 0.0
  %256 = vmatprep.subr.mxu0 0.0
  %257 = vmatpush1.msra.mxu0 0.0
  %258 = vmatprep.subr.mxu0 0.0
  %259 = vmatpush1.msra.mxu0 0.0
  %260 = vmatprep.subr.mxu0 0.0
  %261 = vmatpush1.msra.mxu0 0.0
  %262 = vmatprep.subr.mxu0 0.0
  %263 = vmatpush1.msra.mxu0 0.0
  %264 = vmatprep.subr.mxu0 0.0
  %265 = vmatpush1.msra.mxu0 0.0
  %266 = vmatprep.subr.mxu0 0.0
  %267 = vmatpush1.msra.mxu0 0.0
  %268 = vmatprep.subr.mxu0 0.0
  %269 = vmatpush1.msra.mxu0 0.0
  %270 = vmatprep.subr.mxu0 0.0
  %271 = vmatpush1.msra.mxu0 0.0
  %272 = vmatprep.subr.mxu0 0.0
  %273 = vmatpush1.msra.mxu0 0.0
  %274 = vmatprep.subr.mxu0 0.0
  %275 = vmatpush1.msra.mxu0 0.0
  %276 = vmatprep.subr.mxu0 0.0
  %277 = vmatpush1.msra.mxu0 0.0
  %278 = vmatprep.subr.mxu0 0.0
  %279 = vmatpush1.msra.mxu0 0.0
  %280 = vmatprep.subr.mxu0 0.0
  %281 = vmatpush1.msra.mxu0 0.0
  %282 = vmatprep.subr.mxu0 0.0
  %283 = vmatpush1.msra.mxu0 0.0
  %284 = vmatprep.mubr.f32.mxu0 0.0
  %285 = vmatmul.mubr.f32.gmra.mrb[0].mxu0 %v218
  %v286 = vpop.f32.mrb[0].mxu0
  %v287 = vadd.f32 %v214, %v286
  %v288 = vpop.f32.mrb[0].mxu0
  %289 = vdwg.mxu0
  %v290 = vmax.f32 %v287, 0.0
  %v291 = vld [vmem:[%s7] sm:$0xff]
  %v292 = vld [vmem:[%s7 + $0x8] sm:$0xff]
  %v293 = vld [vmem:[%s7 + $0x10] sm:$0xff]
  %v294 = vld [vmem:[%s7 + $0x18] sm:$0xff]
  %v295 = vld [vmem:[%s7 + $0x20] sm:$0xff]
  %v296 = vld [vmem:[%s7 + $0x28] sm:$0xff]
  %v297 = vld [vmem:[%s7 + $0x30] sm:$0xff]
  %v298 = vld [vmem:[%s7 + $0x38] sm:$0xff]
  %v299 = vld [vmem:[%s8] sm:$0x1]
  %v301 = vlaneseq
  %v302 = vshrl.u32 %v301, 7
  %v303 = vsub.s32 0, %v302
  %v304 = vrot.slane %v299, %v303
  %v307 = vsel %vm216, %v290, 0
  %309 = vmatprep.subr.mxu0 0.0
  %310 = vmatpush1.msra.mxu0 %v291
  %311 = vmatprep.subr.mxu0 0.0
  %312 = vmatpush1.msra.mxu0 %v292
  %313 = vmatprep.subr.mxu0 0.0
  %314 = vmatpush1.msra.mxu0 %v293
  %315 = vmatprep.subr.mxu0 0.0
  %316 = vmatpush1.msra.mxu0 %v294
  %317 = vmatprep.subr.mxu0 0.0
  %318 = vmatpush1.msra.mxu0 %v295
  %319 = vmatprep.subr.mxu0 0.0
  %320 = vmatpush1.msra.mxu0 %v296
  %321 = vmatprep.subr.mxu0 0.0
  %322 = vmatpush1.msra.mxu0 %v297
  %323 = vmatprep.subr.mxu0 0.0
  %324 = vmatpush1.msra.mxu0 %v298
  %325 = vmatprep.subr.mxu0 0.0
  %326 = vmatpush1.msra.mxu0 0.0
  %327 = vmatprep.subr.mxu0 0.0
  %328 = vmatpush1.msra.mxu0 0.0
  %329 = vmatprep.subr.mxu0 0.0
  %330 = vmatpush1.msra.mxu0 0.0
  %331 = vmatprep.subr.mxu0 0.0
  %332 = vmatpush1.msra.mxu0 0.0
  %333 = vmatprep.subr.mxu0 0.0
  %334 = vmatpush1.msra.mxu0 0.0
  %335 = vmatprep.subr.mxu0 0.0
  %336 = vmatpush1.msra.mxu0 0.0
  %337 = vmatprep.subr.mxu0 0.0
  %338 = vmatpush1.msra.mxu0 0.0
  %339 = vmatprep.subr.mxu0 0.0
  %340 = vmatpush1.msra.mxu0 0.0
  %341 = vmatprep.subr.mxu0 0.0
  %342 = vmatpush1.msra.mxu0 0.0
  %343 = vmatprep.subr.mxu0 0.0
  %344 = vmatpush1.msra.mxu0 0.0
  %345 = vmatprep.subr.mxu0 0.0
  %346 = vmatpush1.msra.mxu0 0.0
  %347 = vmatprep.subr.mxu0 0.0
  %348 = vmatpush1.msra.mxu0 0.0
  %349 = vmatprep.subr.mxu0 0.0
  %350 = vmatpush1.msra.mxu0 0.0
  %351 = vmatprep.subr.mxu0 0.0
  %352 = vmatpush1.msra.mxu0 0.0
  %353 = vmatprep.subr.mxu0 0.0
  %354 = vmatpush1.msra.mxu0 0.0
  %355 = vmatprep.subr.mxu0 0.0
  %356 = vmatpush1.msra.mxu0 0.0
  %357 = vmatprep.subr.mxu0 0.0
  %358 = vmatpush1.msra.mxu0 0.0
  %359 = vmatprep.subr.mxu0 0.0
  %360 = vmatpush1.msra.mxu0 0.0
  %361 = vmatprep.subr.mxu0 0.0
  %362 = vmatpush1.msra.mxu0 0.0
  %363 = vmatprep.subr.mxu0 0.0
  %364 = vmatpush1.msra.mxu0 0.0
  %365 = vmatprep.subr.mxu0 0.0
  %366 = vmatpush1.msra.mxu0 0.0
  %367 = vmatprep.subr.mxu0 0.0
  %368 = vmatpush1.msra.mxu0 0.0
  %369 = vmatprep.subr.mxu0 0.0
  %370 = vmatpush1.msra.mxu0 0.0
  %371 = vmatprep.subr.mxu0 0.0
  %372 = vmatpush1.msra.mxu0 0.0
  %373 = vmatprep.mubr.f32.mxu0 0.0
  %374 = vmatmul.mubr.f32.gmra.mrb[0].mxu0 %v307
  %v375 = vpop.f32.mrb[0].mxu0
  %v376 = vadd.f32 %v304, %v375
  %v377 = vpop.f32.mrb[0].mxu0
  %378 = vdwg.mxu0
  %379 = vst.msk [vmem:[%s9] sm:$0xff] %vm36, %v376
  // Predicated region
  $region38: #{tpu_custom_call.1} parent=0 // pred_check
    _
  $region39: #{tpu_custom_call.1} parent=0 // pred_check_branch
    %381 = sbr.rel (0) target = $region41
  $region40: #{tpu_custom_call.1} parent=0 // pred_region
    _
  $region41: #{tpu_custom_call.1} parent=0 // pred_fallthru
    _
  // Predicated region
  $region42: #{tpu_custom_call.1} parent=0 // pred_check
    _
  $region43: #{tpu_custom_call.1} parent=0 // pred_check_branch
    %383 = sbr.rel (0) target = $region45
  $region44: #{tpu_custom_call.1} parent=0 // pred_region
    _
  $region45: #{tpu_custom_call.1} parent=0 // pred_fallthru
    _

</llo_original>
